<compile_context>
chip_gen: v7x
topology: tpu7x:2x2x1
jax: 0.10.0
libtpu: 0.0.40
codegen_flags: <defaults>
</compile_context>

<pallas_src>
import functools

import jax
import jax.numpy as jnp
from jax.experimental import pallas as pl
from jax.experimental.pallas import tpu as pltpu


def _gat_attn_kernel(feat_ref, elt_ref, er_ref, adjt_ref, out_ref, *,
                     num_heads, out_feats, negative_slope):
    """One destination-node tile: dst-major masked softmax + aggregation.

    feat_ref : (N_src, H*F)   resident across grid steps
    elt_ref  : (H, N_src)     resident (source scores, transposed once outside)
    er_ref   : (T_dst, H)     per-tile destination scores
    adjt_ref : (T_dst, N_src) per-tile dst-major adjacency, bf16 {0,1}
    out_ref  : (T_dst, H*F)   lane-dense output block
    """
    adj = adjt_ref[...].astype(jnp.float32)              # (T, N) 0/1 mask
    bias = (adj - 1.0) * jnp.float32(1e30)                # 0 on edges, -1e30 off
    feat = feat_ref[...]                                  # (N_src, H*F)

    outs = []
    for h in range(num_heads):                            # static unroll (H small)
        el_row = elt_ref[h:h + 1, :]                      # (1, N_src)
        er_col = er_ref[:, h:h + 1]                       # (T_dst, 1)
        e = er_col + el_row                               # (T_dst, N_src)
        e = jnp.where(e > 0, e, negative_slope * e)       # leaky relu
        e = e + bias                                      # mask non-edges

        m = jnp.max(e, axis=-1, keepdims=True)            # lane-axis reduce
        p = jnp.exp(e - m) * adj                          # exact 0 off-edge
        s = jnp.sum(p, axis=-1, keepdims=True)            # (T_dst, 1)
        s = jnp.maximum(s, jnp.float32(1e-20))            # zero-in-degree guard
        inv = pl.reciprocal(s, approx=True)               # EUP reciprocal
        inv = inv * (2.0 - s * inv)                       # 1 Newton step on (T,1)
        a = p * inv                                       # multiply on big tile

        fh = feat[:, h * out_feats:(h + 1) * out_feats]   # (N_src, F)
        outs.append(jnp.dot(a.astype(feat.dtype), fh,
                            preferred_element_type=jnp.float32))

    # Single lane-dense store of all heads.
    out_ref[...] = jnp.concatenate(outs, axis=-1).astype(out_ref.dtype)


def gat_conv(x, w, attn_l, attn_r, adj, *, num_heads, out_feats,
             negative_slope=0.2, t_dst=None, feat_dtype=jnp.float32):
    """GATConv forward. adj[i, j] = 1 iff edge i -> j (DGL src->dst)."""
    n_src = x.shape[0]
    n_dst = adj.shape[1]
    hf = num_heads * out_feats

    # ---- Hoisted O(N) projections (plain XLA, computed once) ----------------
    feat = jnp.dot(x, w, preferred_element_type=jnp.float32)       # (N, H*F)
    feat3 = feat.reshape(n_src, num_heads, out_feats)
    el_t = jnp.einsum('nhf,hf->hn', feat3, attn_l)                 # (H, N) src scores
    er = jnp.einsum('nhf,hf->nh', feat3, attn_r)                   # (N, H) dst scores
    feat = feat.astype(feat_dtype)  # bf16 on v6e/v7x halves VMEM/HBM for feat

    # dst-major adjacency; bf16 is exact for a {0,1} mask, halves N^2 stream.
    adj_t = adj.T.astype(jnp.bfloat16)                             # (N_dst, N_src)

    # ---- Tile size over the destination axis --------------------------------
    if t_dst is None:
        t_dst = min(n_dst, 512)      # v7x-safe default (64 MiB VMEM)
    t_dst = min(t_dst, n_dst)
    grid = (pl.cdiv(n_dst, t_dst),)

    # ---- Explicit VMEM budget ------------------------------------------------
    itemsize = jnp.dtype(feat_dtype).itemsize
    vmem_est = (n_src * hf * itemsize + num_heads * n_src * 4       # resident
                + 2 * (t_dst * n_src * 2                            # adj tiles (bf16, 2 bufs)
                       + t_dst * num_heads * 4 + t_dst * hf * 4)    # er/out tiles (2 bufs)
                + 6 * t_dst * n_src * 4)                            # e/p/a f32 temps
    vmem_limit = int(min(max(2 * vmem_est, 32 * 1024 * 1024),
                         64 * 1024 * 1024))

    kernel = functools.partial(_gat_attn_kernel,
                               num_heads=num_heads,
                               out_feats=out_feats,
                               negative_slope=negative_slope)

    out_flat = pl.pallas_call(
        kernel,
        out_shape=jax.ShapeDtypeStruct((n_dst, hf), jnp.float32),
        grid=grid,
        in_specs=[
            pl.BlockSpec((n_src, hf), lambda j: (0, 0)),            # feat (resident)
            pl.BlockSpec((num_heads, n_src), lambda j: (0, 0)),     # el_t (resident)
            pl.BlockSpec((t_dst, num_heads), lambda j: (j, 0)),     # er tile
            pl.BlockSpec((t_dst, n_src), lambda j: (j, 0)),         # adj_t tile
        ],
        out_specs=pl.BlockSpec((t_dst, hf), lambda j: (j, 0)),
        compiler_params=pltpu.CompilerParams(
            dimension_semantics=("parallel",),
            vmem_limit_bytes=vmem_limit),
    )(feat, el_t, er, adj_t)

    return out_flat.reshape(n_dst, num_heads, out_feats)


def gat_conv_ref(x, w, attn_l, attn_r, adj, *, num_heads, out_feats,
                 negative_slope=0.2):
    """Pure-JAX reference for verification."""
    n = x.shape[0]
    feat = (x @ w).reshape(n, num_heads, out_feats)
    el = jnp.sum(feat * attn_l[None], axis=-1)                  # (N, H)
    er = jnp.sum(feat * attn_r[None], axis=-1)                  # (N, H)
    e = el[:, None, :] + er[None, :, :]                         # (Nsrc, Ndst, H)
    e = jnp.where(e > 0, e, negative_slope * e)
    mask = adj[..., None] > 0
    masked = jnp.where(mask, e, -1e30)
    m = jnp.max(masked, axis=0, keepdims=True)
    p = jnp.exp(masked - m) * adj[..., None]
    s = jnp.sum(p, axis=0, keepdims=True)
    a = p / jnp.maximum(s, 1e-20)                               # (Nsrc, Ndst, H)
    return jnp.einsum('ijh,ihf->jhf', a, feat)


def _make_params(key, n, in_feats, out_feats, num_heads):
    kx, kw, kl, kr = jax.random.split(key, 4)
    gain = jnp.sqrt(2.0)
    w_std = gain * jnp.sqrt(2.0 / (in_feats + num_heads * out_feats))
    a_std = gain * jnp.sqrt(2.0 / (num_heads * out_feats + out_feats))
    x = jax.random.normal(kx, (n, in_feats), dtype=jnp.float32)
    w = w_std * jax.random.normal(kw, (in_feats, num_heads * out_feats),
                                  dtype=jnp.float32)
    attn_l = a_std * jax.random.normal(kl, (num_heads, out_feats),
                                       dtype=jnp.float32)
    attn_r = a_std * jax.random.normal(kr, (num_heads, out_feats),
                                       dtype=jnp.float32)
    return x, w, attn_l, attn_r


if __name__ == "__main__":
    key = jax.random.PRNGKey(0)
    k1, k2, kedges = jax.random.split(key, 3)

    # ---- Test 1: tiny problem, grid of 2 dst tiles --------------------------
    N, IN_FEATS, OUT_FEATS, NUM_HEADS = 16, 8, 8, 2
    x, w, attn_l, attn_r = _make_params(k1, N, IN_FEATS, OUT_FEATS, NUM_HEADS)
    adj = jnp.eye(N, dtype=jnp.float32)
    src = jnp.arange(N)
    adj = adj.at[src, (src + 1) % N].set(1.0)        # self loops + directed ring

    out = gat_conv(x, w, attn_l, attn_r, adj,
                   num_heads=NUM_HEADS, out_feats=OUT_FEATS, t_dst=8)
    out = jax.block_until_ready(out)
    ref = gat_conv_ref(x, w, attn_l, attn_r, adj,
                       num_heads=NUM_HEADS, out_feats=OUT_FEATS)
    assert out.shape == (N, NUM_HEADS, OUT_FEATS)
    assert jnp.allclose(out, ref, atol=1e-3, rtol=1e-3), "test1 mismatch"

    # ---- Test 2: larger problem, 8-aligned tiles, zero-in-degree node -------
    N2, IN2, OUT2, H2 = 256, 32, 16, 2
    x2, w2, al2, ar2 = _make_params(k2, N2, IN2, OUT2, H2)
    src2 = jnp.arange(N2)
    adj2 = (jnp.eye(N2, dtype=jnp.float32)
            + jnp.zeros((N2, N2)).at[src2, (src2 + 1) % N2].set(1.0)
            + jax.random.bernoulli(kedges, 0.05, (N2, N2)).astype(jnp.float32))
    adj2 = (adj2 > 0).astype(jnp.float32)
    adj2 = adj2.at[:, 5].set(0.0)                    # node 5: zero in-degree

    out2 = gat_conv(x2, w2, al2, ar2, adj2,
                    num_heads=H2, out_feats=OUT2, t_dst=64)
    out2 = jax.block_until_ready(out2)
    ref2 = gat_conv_ref(x2, w2, al2, ar2, adj2, num_heads=H2, out_feats=OUT2)
    assert out2.shape == (N2, H2, OUT2)
    assert jnp.allclose(out2, ref2, atol=1e-3, rtol=1e-3), "test2 mismatch"
    assert jnp.allclose(out2[5], 0.0), "zero-in-degree node must be zero"

    print("KERNEL_OK")
</pallas_src>

<mosaic_0001>
module attributes {stable_mosaic.version = 11 : i64} {
  func.func @_gat_attn_kernel(%arg0: i32, %arg1: memref<16x16xf32, #tpu.memory_space<vmem>>, %arg2: memref<2x16xf32, #tpu.memory_space<vmem>>, %arg3: memref<8x2xf32, #tpu.memory_space<vmem>>, %arg4: memref<8x16xbf16, #tpu.memory_space<vmem>>, %arg5: memref<8x16xf32, #tpu.memory_space<vmem>>) attributes {dimension_semantics = [#tpu.dimension_semantics<parallel>], iteration_bounds = array<i64: 2>, scalar_prefetch = 0 : i64, scratch_operands = 0 : i64, tpu.core_type = #tpu.core_type<tc>, window_params = [{pipeline_mode = #tpu.pipeline_mode<synchronous>, transform_indices = @transform_0, window_bounds = array<i64: 16, 16>}, {pipeline_mode = #tpu.pipeline_mode<synchronous>, transform_indices = @transform_1, window_bounds = array<i64: 2, 16>}, {transform_indices = @transform_2, window_bounds = array<i64: 8, 2>}, {transform_indices = @transform_3, window_bounds = array<i64: 8, 16>}, {transform_indices = @transform_4, window_bounds = array<i64: 8, 16>}]} {
    %c0 = arith.constant 0 : index
    %c0_0 = arith.constant 0 : index
    %0 = vector.load %arg4[%c0, %c0_0] : memref<8x16xbf16, #tpu.memory_space<vmem>>, vector<8x16xbf16>
    %1 = arith.extf %0 : vector<8x16xbf16> to vector<8x16xf32>
    %cst = arith.constant 1.000000e+00 : f32
    %2 = vector.broadcast %cst : f32 to vector<8x16xf32>
    %3 = arith.subf %1, %2 : vector<8x16xf32>
    %cst_1 = arith.constant 1.000000e+30 : f32
    %4 = vector.broadcast %cst_1 : f32 to vector<8x16xf32>
    %5 = arith.mulf %3, %4 : vector<8x16xf32>
    %c0_2 = arith.constant 0 : index
    %c0_3 = arith.constant 0 : index
    %6 = vector.load %arg1[%c0_2, %c0_3] : memref<16x16xf32, #tpu.memory_space<vmem>>, vector<16x16xf32>
    %c0_4 = arith.constant 0 : index
    %c0_5 = arith.constant 0 : index
    %7 = vector.load %arg2[%c0_4, %c0_5] : memref<2x16xf32, #tpu.memory_space<vmem>>, vector<1x16xf32>
    %c0_6 = arith.constant 0 : index
    %c0_7 = arith.constant 0 : index
    %8 = vector.load %arg3[%c0_6, %c0_7] : memref<8x2xf32, #tpu.memory_space<vmem>>, vector<8x1xf32>
    %9 = vector.broadcast %8 : vector<8x1xf32> to vector<8x16xf32>
    %10 = vector.broadcast %7 : vector<1x16xf32> to vector<8x16xf32>
    %11 = arith.addf %9, %10 : vector<8x16xf32>
    %cst_8 = arith.constant 0.000000e+00 : f32
    %12 = vector.broadcast %cst_8 : f32 to vector<8x16xf32>
    %13 = arith.cmpf ogt, %11, %12 : vector<8x16xf32>
    %cst_9 = arith.constant 2.000000e-01 : f32
    %14 = vector.broadcast %cst_9 : f32 to vector<8x16xf32>
    %15 = arith.mulf %14, %11 : vector<8x16xf32>
    %16 = arith.select %13, %11, %15 : vector<8x16xi1>, vector<8x16xf32>
    %17 = arith.addf %16, %5 : vector<8x16xf32>
    %cst_10 = arith.constant dense<0xFF800000> : vector<8xf32>
    %18 = vector.multi_reduction <maximumf>, %17, %cst_10 [1] : vector<8x16xf32> to vector<8xf32>
    %19 = vector.shape_cast %18 : vector<8xf32> to vector<8x1xf32>
    %20 = vector.broadcast %19 : vector<8x1xf32> to vector<8x16xf32>
    %21 = arith.subf %17, %20 : vector<8x16xf32>
    %22 = math.exp %21 : vector<8x16xf32>
    %23 = arith.mulf %22, %1 : vector<8x16xf32>
    %cst_11 = arith.constant dense<0.000000e+00> : vector<8xf32>
    %24 = vector.multi_reduction <add>, %23, %cst_11 [1] : vector<8x16xf32> to vector<8xf32>
    %25 = vector.shape_cast %24 : vector<8xf32> to vector<8x1xf32>
    %cst_12 = arith.constant 9.99999968E-21 : f32
    %26 = vector.broadcast %cst_12 : f32 to vector<8x1xf32>
    %27 = arith.maximumf %25, %26 : vector<8x1xf32>
    %28 = tpu.reciprocal %27 {approx = true} : vector<8x1xf32> -> vector<8x1xf32>
    %29 = arith.mulf %27, %28 : vector<8x1xf32>
    %cst_13 = arith.constant 2.000000e+00 : f32
    %30 = vector.broadcast %cst_13 : f32 to vector<8x1xf32>
    %31 = arith.subf %30, %29 : vector<8x1xf32>
    %32 = arith.mulf %28, %31 : vector<8x1xf32>
    %33 = vector.broadcast %32 : vector<8x1xf32> to vector<8x16xf32>
    %34 = arith.mulf %23, %33 : vector<8x16xf32>
    %35 = vector.extract_strided_slice %6 {offsets = [0, 0], sizes = [16, 8], strides = [1, 1]} : vector<16x16xf32> to vector<16x8xf32>
    %cst_14 = arith.constant dense<0.000000e+00> : vector<8x8xf32>
    %36 = tpu.matmul %34, %35, %cst_14 {dimension_numbers = #tpu.dot_dimension_numbers<[1], [0], [0], [1], [0, 0, 1, 1], [], []>} : vector<8x16xf32>, vector<16x8xf32>, vector<8x8xf32> -> vector<8x8xf32>
    %c1 = arith.constant 1 : index
    %c0_15 = arith.constant 0 : index
    %37 = vector.load %arg2[%c1, %c0_15] : memref<2x16xf32, #tpu.memory_space<vmem>>, vector<1x16xf32>
    %c0_16 = arith.constant 0 : index
    %c1_17 = arith.constant 1 : index
    %38 = vector.load %arg3[%c0_16, %c1_17] : memref<8x2xf32, #tpu.memory_space<vmem>>, vector<8x1xf32>
    %39 = vector.broadcast %38 : vector<8x1xf32> to vector<8x16xf32>
    %40 = vector.broadcast %37 : vector<1x16xf32> to vector<8x16xf32>
    %41 = arith.addf %39, %40 : vector<8x16xf32>
    %cst_18 = arith.constant 0.000000e+00 : f32
    %42 = vector.broadcast %cst_18 : f32 to vector<8x16xf32>
    %43 = arith.cmpf ogt, %41, %42 : vector<8x16xf32>
    %cst_19 = arith.constant 2.000000e-01 : f32
    %44 = vector.broadcast %cst_19 : f32 to vector<8x16xf32>
    %45 = arith.mulf %44, %41 : vector<8x16xf32>
    %46 = arith.select %43, %41, %45 : vector<8x16xi1>, vector<8x16xf32>
    %47 = arith.addf %46, %5 : vector<8x16xf32>
    %cst_20 = arith.constant dense<0xFF800000> : vector<8xf32>
    %48 = vector.multi_reduction <maximumf>, %47, %cst_20 [1] : vector<8x16xf32> to vector<8xf32>
    %49 = vector.shape_cast %48 : vector<8xf32> to vector<8x1xf32>
    %50 = vector.broadcast %49 : vector<8x1xf32> to vector<8x16xf32>
    %51 = arith.subf %47, %50 : vector<8x16xf32>
    %52 = math.exp %51 : vector<8x16xf32>
    %53 = arith.mulf %52, %1 : vector<8x16xf32>
    %cst_21 = arith.constant dense<0.000000e+00> : vector<8xf32>
    %54 = vector.multi_reduction <add>, %53, %cst_21 [1] : vector<8x16xf32> to vector<8xf32>
    %55 = vector.shape_cast %54 : vector<8xf32> to vector<8x1xf32>
    %cst_22 = arith.constant 9.99999968E-21 : f32
    %56 = vector.broadcast %cst_22 : f32 to vector<8x1xf32>
    %57 = arith.maximumf %55, %56 : vector<8x1xf32>
    %58 = tpu.reciprocal %57 {approx = true} : vector<8x1xf32> -> vector<8x1xf32>
    %59 = arith.mulf %57, %58 : vector<8x1xf32>
    %cst_23 = arith.constant 2.000000e+00 : f32
    %60 = vector.broadcast %cst_23 : f32 to vector<8x1xf32>
    %61 = arith.subf %60, %59 : vector<8x1xf32>
    %62 = arith.mulf %58, %61 : vector<8x1xf32>
    %63 = vector.broadcast %62 : vector<8x1xf32> to vector<8x16xf32>
    %64 = arith.mulf %53, %63 : vector<8x16xf32>
    %65 = vector.extract_strided_slice %6 {offsets = [0, 8], sizes = [16, 8], strides = [1, 1]} : vector<16x16xf32> to vector<16x8xf32>
    %cst_24 = arith.constant dense<0.000000e+00> : vector<8x8xf32>
    %66 = tpu.matmul %64, %65, %cst_24 {dimension_numbers = #tpu.dot_dimension_numbers<[1], [0], [0], [1], [0, 0, 1, 1], [], []>} : vector<8x16xf32>, vector<16x8xf32>, vector<8x8xf32> -> vector<8x8xf32>
    %67 = tpu.concatenate %36, %66 in 1 : vector<8x8xf32>, vector<8x8xf32> -> vector<8x16xf32>
    %c0_25 = arith.constant 0 : index
    %c0_26 = arith.constant 0 : index
    %68 = vector.load %arg5[%c0_25, %c0_26] : memref<8x16xf32, #tpu.memory_space<vmem>>, vector<8x16xf32>
    tpu.vector_store %arg5[%c0_25, %c0_26], %67 {strides = array<i32>} : memref<8x16xf32, #tpu.memory_space<vmem>>, vector<8x16xf32>,
    return
  }
  func.func @transform_0(%arg0: i32) -> (i32, i32) {
    %c0_i32 = arith.constant 0 : i32
    %c0_i32_0 = arith.constant 0 : i32
    %c0_i32_1 = arith.constant 0 : i32
    return %c0_i32, %c0_i32_0 : i32, i32
  }
  func.func @transform_1(%arg0: i32) -> (i32, i32) {
    %c0_i32 = arith.constant 0 : i32
    %c0_i32_0 = arith.constant 0 : i32
    %c0_i32_1 = arith.constant 0 : i32
    return %c0_i32, %c0_i32_0 : i32, i32
  }
  func.func @transform_2(%arg0: i32) -> (i32, i32) {
    %c0_i32 = arith.constant 0 : i32
    %c0_i32_0 = arith.constant 0 : i32
    return %arg0, %c0_i32 : i32, i32
  }
  func.func @transform_3(%arg0: i32) -> (i32, i32) {
    %c0_i32 = arith.constant 0 : i32
    %c0_i32_0 = arith.constant 0 : i32
    return %arg0, %c0_i32 : i32, i32
  }
  func.func @transform_4(%arg0: i32) -> (i32, i32) {
    %c0_i32 = arith.constant 0 : i32
    %c0_i32_0 = arith.constant 0 : i32
    return %arg0, %c0_i32 : i32, i32
  }
}

</mosaic_0001>

<llo_original>
// kernel: tpu_custom_call.1
$region0: #{tpu_custom_call.1}
  #allocation0 [shape = 'u32[]', space=smem, size = 0x4, offset = 0x4, fixed_abs, tag = 'smem constant byte address 0x4 - core index']
  #allocation1 [shape = 'u32[144,128]{1,0:T(1,128)}', space=vmem, size = 0x12000, scoped, tag = 'internal scratch']
  %s0 = inlined_call_operand.vmem [shape: f32[16,16], index: 0, kind: input, shape index: {}]
  %s1 = inlined_call_operand.hbm [shape: f32[2,16], index: 1, kind: input, shape index: {}]
  %s2 = inlined_call_operand.vmem [shape: f32[16,2], index: 2, kind: input, shape index: {}]
  %s3 = inlined_call_operand.vmem [shape: bf16[16,16], index: 3, kind: input, shape index: {}]
  %s4 = inlined_call_operand.hbm [shape: f32[16,16], index: 4, kind: output, shape index: {}]
  %s5 = sld [smem:[#allocation0]]
  $region53: #{tpu_custom_call.1} parent=0
    _
  %s7 = ssub.s32 1, %s5
  %s8 = scalar_select 0, %s7, %s5
  $region1: #{tpu_custom_call.1} parent=0
    #allocation2 [shape = 'u8[1024]{0}', space=vmem, size = 0x400, scoped, tag = 'input window, operand 1, single buffered']
    #allocation3 [shape = 's32[2]{0}', space=sflag, size = 0x8, scoped, tag = 'scoped memory for tpu_custom_call.1']
    #allocation4 [shape = 's32[2]{0}', space=sflag, size = 0x8, scoped, tag = 'scoped memory for tpu_custom_call.1']
    #allocation5 [shape = 'u8[8192]{0}', space=vmem, size = 0x2000, scoped, tag = 'output window, operand 0']
    %9 = vsyncpa [#allocation3], 0
    %10 = vsyncpa [#allocation4], 0
    %s11 = scalar_lea.sflag [#allocation4], 1
    %12 = vsyncpa %s11, 0
    loop: start=0, step=1, limit=4
    $region2: #{tpu_custom_call.1} parent=1 // loop_pre_header
      _
    $region3: #{tpu_custom_call.1} parent=1 // loop_header
      %s14 = sphi 0, %s18
      %p15 = scmp.ge.s32.totalorder %s14, 4
      %s22 = sphi 0, %s22
      %s24 = sphi 0, %s22
      %s25 = sphi 0, %s24
      %s39 = sphi 0, %s25
      %s43 = sphi 0, %s43
      %s45 = sphi 0, %s43
      %s46 = sphi 0, %s45
      %s60 = sphi 0, %s46
      %s66 = sphi 0, %s68
      %s69 = sphi 0, %s66
      %s70 = sphi 0, %s69
      %s86 = sphi 0, %s70
      %s92 = sphi 0, %s94
      %s95 = sphi 0, %s92
      %s96 = sphi 0, %s95
      %s112 = sphi 0, %s96
      %s118 = sphi 0, %s120
      %s121 = sphi 0, %s118
      %s122 = sphi 0, %s121
      %s138 = sphi 0, %s122
    $region4: #{tpu_custom_call.1} parent=1 // loop_header_branch
      %17 = sbr.rel (%p15) target = $region8
    $region5: #{tpu_custom_call.1} parent=1 // loop_body
      %s19 = ssub.s32 %s14, 1
      %s20 = ssub.s32 %s14, 2
      %s21 = sadd.s32 %s14, 1
      %s23 = sadd.s32 %s22, 1
      %p26 = scmp.eq.s32.totalorder %s14, 1
      %p27 = scmp.ne.s32.totalorder %s22, %s24
      %p28 = scmp.eq.s32.totalorder %s14, 0
      %p29 = por %p27, %p28
      %p30 = scmp.ne.s32.totalorder %s22, %s24
      %p31 = scmp.eq.s32.totalorder %s19, 1
      %p32 = por %p30, %p31
      %p33 = scmp.ne.s32.totalorder %s24, %s25
      %p34 = scmp.eq.s32.totalorder %s19, 0
      %p35 = por %p33, %p34
      %p36 = scmp.ne.s32.totalorder %s24, %s25
      %p37 = scmp.eq.s32.totalorder %s20, 1
      %p38 = por %p36, %p37
      %p40 = scmp.ne.s32.totalorder %s25, %s39
      %p41 = scmp.eq.s32.totalorder %s20, 0
      %p42 = por %p40, %p41
      %s44 = sadd.s32 %s43, 1
      %p47 = scmp.eq.s32.totalorder %s14, 1
      %p48 = scmp.ne.s32.totalorder %s43, %s45
      %p49 = scmp.eq.s32.totalorder %s14, 0
      %p50 = por %p48, %p49
      %p51 = scmp.ne.s32.totalorder %s43, %s45
      %p52 = scmp.eq.s32.totalorder %s19, 1
      %p53 = por %p51, %p52
      %p54 = scmp.ne.s32.totalorder %s45, %s46
      %p55 = scmp.eq.s32.totalorder %s19, 0
      %p56 = por %p54, %p55
      %p57 = scmp.ne.s32.totalorder %s45, %s46
      %p58 = scmp.eq.s32.totalorder %s20, 1
      %p59 = por %p57, %p58
      %p61 = scmp.ne.s32.totalorder %s46, %s60
      %p62 = scmp.eq.s32.totalorder %s20, 0
      %p63 = por %p61, %p62
      %s64 = ssub.s32 %s14, %s21
      %p65 = scmp.eq.s32.totalorder %s64, 0
      %s67 = sadd.s32 %s66, 1
      %s68 = scalar_select %p65, %s66, %s67
      %p71 = pneg %p65
      %p72 = scmp.eq.s32.totalorder %s14, 1
      %p73 = por %p71, %p72
      %p74 = scmp.ne.s32.totalorder %s66, %s69
      %p75 = scmp.eq.s32.totalorder %s14, 0
      %p76 = por %p74, %p75
      %p77 = scmp.ne.s32.totalorder %s66, %s69
      %p78 = scmp.eq.s32.totalorder %s19, 1
      %p79 = por %p77, %p78
      %p80 = scmp.ne.s32.totalorder %s69, %s70
      %p81 = scmp.eq.s32.totalorder %s19, 0
      %p82 = por %p80, %p81
      %p83 = scmp.ne.s32.totalorder %s69, %s70
      %p84 = scmp.eq.s32.totalorder %s20, 1
      %p85 = por %p83, %p84
      %p87 = scmp.ne.s32.totalorder %s70, %s86
      %p88 = scmp.eq.s32.totalorder %s20, 0
      %p89 = por %p87, %p88
      %s90 = ssub.s32 %s14, %s21
      %p91 = scmp.eq.s32.totalorder %s90, 0
      %s93 = sadd.s32 %s92, 1
      %s94 = scalar_select %p91, %s92, %s93
      %p97 = pneg %p91
      %p98 = scmp.eq.s32.totalorder %s14, 1
      %p99 = por %p97, %p98
      %p100 = scmp.ne.s32.totalorder %s92, %s95
      %p101 = scmp.eq.s32.totalorder %s14, 0
      %p102 = por %p100, %p101
      %p103 = scmp.ne.s32.totalorder %s92, %s95
      %p104 = scmp.eq.s32.totalorder %s19, 1
      %p105 = por %p103, %p104
      %p106 = scmp.ne.s32.totalorder %s95, %s96
      %p107 = scmp.eq.s32.totalorder %s19, 0
      %p108 = por %p106, %p107
      %p109 = scmp.ne.s32.totalorder %s95, %s96
      %p110 = scmp.eq.s32.totalorder %s20, 1
      %p111 = por %p109, %p110
      %p113 = scmp.ne.s32.totalorder %s96, %s112
      %p114 = scmp.eq.s32.totalorder %s20, 0
      %p115 = por %p113, %p114
      %s116 = ssub.s32 %s14, %s21
      %p117 = scmp.eq.s32.totalorder %s116, 0
      %s119 = sadd.s32 %s118, 1
      %s120 = scalar_select %p117, %s118, %s119
      %p123 = pneg %p117
      %p124 = scmp.eq.s32.totalorder %s14, 1
      %p125 = por %p123, %p124
      %p126 = scmp.ne.s32.totalorder %s118, %s121
      %p127 = scmp.eq.s32.totalorder %s14, 0
      %p128 = por %p126, %p127
      %p129 = scmp.ne.s32.totalorder %s118, %s121
      %p130 = scmp.eq.s32.totalorder %s19, 1
      %p131 = por %p129, %p130
      %p132 = scmp.ne.s32.totalorder %s121, %s122
      %p133 = scmp.eq.s32.totalorder %s19, 0
      %p134 = por %p132, %p133
      %p135 = scmp.ne.s32.totalorder %s121, %s122
      %p136 = scmp.eq.s32.totalorder %s20, 1
      %p137 = por %p135, %p136
      %p139 = scmp.ne.s32.totalorder %s122, %s138
      %p140 = scmp.eq.s32.totalorder %s20, 0
      %p141 = por %p139, %p140
      %p142 = scmp.le.s32.totalorder 1, %s14
      %p143 = scmp.lt.s32.totalorder %s14, 3
      %p144 = pnand %p142, %p143
      %p145 = pneg %p144
      // Predicated region
      $region9: #{tpu_custom_call.1} parent=5 // pred_check
        _
      $region10: #{tpu_custom_call.1} parent=5 // pred_check_branch
        %147 = sbr.rel (%p144) target = $region12
      $region11: #{tpu_custom_call.1} parent=5 // pred_region
        %s148 = ssub.s32 %s14, 1
        // Predicated region
        $region13: #{tpu_custom_call.1} parent=11 // pred_check
          %p149 = pneg %p35
        $region14: #{tpu_custom_call.1} parent=11 // pred_check_branch
          %151 = sbr.rel (%p149) target = $region16
        $region15: #{tpu_custom_call.1} parent=11 // pred_region
          _
        $region16: #{tpu_custom_call.1} parent=11 // pred_fallthru
          _
        // Predicated region
        $region17: #{tpu_custom_call.1} parent=11 // pred_check
          %p152 = pneg %p56
        $region18: #{tpu_custom_call.1} parent=11 // pred_check_branch
          %154 = sbr.rel (%p152) target = $region20
        $region19: #{tpu_custom_call.1} parent=11 // pred_region
          %s156 = ssub.s32 32, 32
          %157 = vsyncadd [#allocation3], %s156
          %s159 = sshll.u32 [#allocation2], 4
          %s160 = int_to_ptr.vmem [resolvable:$true] %s159
          %162 = dma.hbm_to_vmem [thread:$0]  %s1, 32, %s160, [#allocation3]
        $region20: #{tpu_custom_call.1} parent=11 // pred_fallthru
          _
      $region12: #{tpu_custom_call.1} parent=5 // pred_fallthru
        _
      %p163 = scmp.lt.s32.totalorder %s14, 2
      // Predicated region
      $region21: #{tpu_custom_call.1} parent=5 // pred_check
        %p164 = pneg %p163
      $region22: #{tpu_custom_call.1} parent=5 // pred_check_branch
        %166 = sbr.rel (%p164) target = $region24
      $region23: #{tpu_custom_call.1} parent=5 // pred_region
        // Predicated region
        $region25: #{tpu_custom_call.1} parent=23 // pred_check
          %p167 = pneg %p76
        $region26: #{tpu_custom_call.1} parent=23 // pred_check_branch
          %169 = sbr.rel (%p167) target = $region28
        $region27: #{tpu_custom_call.1} parent=23 // pred_region
          %p170 = scmp.lt.s32.totalorder %s14, 1
          %s171 = scalar_select %p170, %s14, 1
          %s172 = smul.addr %s171, 8
          %s173 = scalar_lea.vmem %s2, %s172
        $region28: #{tpu_custom_call.1} parent=23 // pred_fallthru
          _
        // Predicated region
        $region29: #{tpu_custom_call.1} parent=23 // pred_check
          %p174 = pneg %p102
        $region30: #{tpu_custom_call.1} parent=23 // pred_check_branch
          %176 = sbr.rel (%p174) target = $region32
        $region31: #{tpu_custom_call.1} parent=23 // pred_region
          %p177 = scmp.lt.s32.totalorder %s14, 1
          %s178 = scalar_select %p177, %s14, 1
          %s179 = smul.addr %s178, 4
          %s180 = scalar_lea.vmem %s3, %s179
        $region32: #{tpu_custom_call.1} parent=23 // pred_fallthru
          _
      $region24: #{tpu_custom_call.1} parent=5 // pred_fallthru
        _
      %p181 = scmp.le.s32.totalorder 1, %s14
      %p182 = scmp.lt.s32.totalorder %s14, 3
      %p183 = pnand %p181, %p182
      %p184 = pneg %p183
      // Predicated region
      $region33: #{tpu_custom_call.1} parent=5 // pred_check
        _
      $region34: #{tpu_custom_call.1} parent=5 // pred_check_branch
        %186 = sbr.rel (%p183) target = $region36
      $region35: #{tpu_custom_call.1} parent=5 // pred_region
        %s187 = ssub.s32 %s14, 1
        // Predicated region
        $region37: #{tpu_custom_call.1} parent=35 // pred_check
          %p188 = pneg %p56
        $region38: #{tpu_custom_call.1} parent=35 // pred_check_branch
          %190 = sbr.rel (%p188) target = $region40
        $region39: #{tpu_custom_call.1} parent=35 // pred_region
          %191 = dma.done [#allocation3], 32
        $region40: #{tpu_custom_call.1} parent=35 // pred_fallthru
          _
        %p192 = pneg %p35
        %p193 = pneg %p32
        %p194 = pneg %p56
        %p195 = pneg %p53
        %p196 = scmp.lt.s32.totalorder %s19, 1
        %s197 = scalar_select %p196, %s19, 1
        %s198 = smul.addr %s197, 8
        %s199 = scalar_lea.vmem %s2, %s198
        %p200 = pneg %p82
        %p201 = pneg %p79
        %p202 = scmp.lt.s32.totalorder %s19, 1
        %s203 = scalar_select %p202, %s19, 1
        %s204 = smul.addr %s203, 4
        %s205 = scalar_lea.vmem %s3, %s204
        %p206 = pneg %p108
        %p207 = pneg %p105
        %p208 = pneg %p134
        %p209 = pneg %p131
        %s210 = sand.u32 %s121, 1
        %s211 = scalar_lea.sflag [#allocation4], %s210
        %s212 = sand.u32 %s121, 1
        %s213 = smul.addr %s212, 8
        %s214 = scalar_lea.vmem [#allocation5], %s213
        %p215 = scmp.lt.s32.totalorder %s19, 1
        %s216 = scalar_select %p215, %s19, 1
        %s217 = smul.addr %s216, 8
        %s218 = scalar_lea.vmem %s2, %s217
        %p219 = scmp.lt.s32.totalorder %s19, 1
        %s220 = scalar_select %p219, %s19, 1
        %s221 = smul.addr %s220, 4
        %s222 = scalar_lea.vmem %s3, %s221
        %v223 = vld [vmem:[%s222] sm:$0xf]
        %v224 = vunpack.c.l.bf16 %v223
        %v225 = vsub.f32 %v224, 1.0
        %v226 = vmul.f32 %v225, 1e+30
        %v227 = vld [vmem:[%s0] sm:$0xff]
        %v228 = vld [vmem:[%s0 + $0x8] sm:$0xff]
        %v229 = vld [vmem:[#allocation2] sm:$0x1]
        %v230 = vld [vmem:[%s218] sm:$0xff]
        %232 = vset.pattern.permute.xlu0 0
        %233 = vperm.xlu0 %232, %v230
        %v234 = vpop.permute.xlu0 %233
        %v236 = vlaneseq
        %v237 = vshrl.u32 %v236, 7
        %v238 = vsub.s32 0, %v237
        %v239 = vrot.slane %v229, %v238
        %v240 = vadd.f32 %v234, %v239
        %vm241 = vcmp.gt.f32.partialorder %v240, 0.0
        %v242 = vmul.f32 %v240, 0.2
        %v243 = vsel %vm241, %v240, %v242
        %v244 = vadd.f32 %v243, %v226
        %vm245 = vcmask 130048
        %v246 = vsel %vm245, %v244, -inf
        %247 = vmax.xlane.f32.xlu0 %v246
        %v248 = vpop.xlane.xlu0 %247
        %v249 = vsub.f32 %v244, %v248
        %v250 = vmul.f32 %v249, 1.442695
        %v251 = vpow.pop %v250
        %v252 = vmul.f32 %v251, %v224
        %v253 = vsel %vm245, %v252, 0.0
        %254 = vadd.xlane.f32.xlu0 %v253
        %v255 = vpop.xlane.xlu0 %254
        %v256 = vmax.f32 %v255, 1e-20
        %v257 = vrcp.pop %v256
        %v258 = vmul.f32 %v256, %v257
        %v259 = vsub.f32 2.0, %v258
        %v260 = vmul.f32 %v257, %v259
        %v261 = vmul.f32 %v252, %v260
        %v263 = vsel %vm245, %v261, 0
        %265 = vmatprep.subr.mxu0 0.0
        %266 = vmatpush1.msra.mxu0 %v227
        %267 = vmatprep.subr.mxu0 0.0
        %268 = vmatpush1.msra.mxu0 %v228
        %269 = vmatprep.subr.mxu0 0.0
        %270 = vmatpush1.msra.mxu0 0.0
        %271 = vmatprep.subr.mxu0 0.0
        %272 = vmatpush1.msra.mxu0 0.0
        %273 = vmatprep.subr.mxu0 0.0
        %274 = vmatpush1.msra.mxu0 0.0
        %275 = vmatprep.subr.mxu0 0.0
        %276 = vmatpush1.msra.mxu0 0.0
        %277 = vmatprep.subr.mxu0 0.0
        %278 = vmatpush1.msra.mxu0 0.0
        %279 = vmatprep.subr.mxu0 0.0
        %280 = vmatpush1.msra.mxu0 0.0
        %281 = vmatprep.subr.mxu0 0.0
        %282 = vmatpush1.msra.mxu0 0.0
        %283 = vmatprep.subr.mxu0 0.0
        %284 = vmatpush1.msra.mxu0 0.0
        %285 = vmatprep.subr.mxu0 0.0
        %286 = vmatpush1.msra.mxu0 0.0
        %287 = vmatprep.subr.mxu0 0.0
        %288 = vmatpush1.msra.mxu0 0.0
        %289 = vmatprep.subr.mxu0 0.0
        %290 = vmatpush1.msra.mxu0 0.0
        %291 = vmatprep.subr.mxu0 0.0
        %292 = vmatpush1.msra.mxu0 0.0
        %293 = vmatprep.subr.mxu0 0.0
        %294 = vmatpush1.msra.mxu0 0.0
        %295 = vmatprep.subr.mxu0 0.0
        %296 = vmatpush1.msra.mxu0 0.0
        %297 = vmatprep.subr.mxu0 0.0
        %298 = vmatpush1.msra.mxu0 0.0
        %299 = vmatprep.subr.mxu0 0.0
        %300 = vmatpush1.msra.mxu0 0.0
        %301 = vmatprep.subr.mxu0 0.0
        %302 = vmatpush1.msra.mxu0 0.0
        %303 = vmatprep.subr.mxu0 0.0
        %304 = vmatpush1.msra.mxu0 0.0
        %305 = vmatprep.subr.mxu0 0.0
        %306 = vmatpush1.msra.mxu0 0.0
        %307 = vmatprep.subr.mxu0 0.0
        %308 = vmatpush1.msra.mxu0 0.0
        %309 = vmatprep.subr.mxu0 0.0
        %310 = vmatpush1.msra.mxu0 0.0
        %311 = vmatprep.subr.mxu0 0.0
        %312 = vmatpush1.msra.mxu0 0.0
        %313 = vmatprep.subr.mxu0 0.0
        %314 = vmatpush1.msra.mxu0 0.0
        %315 = vmatprep.subr.mxu0 0.0
        %316 = vmatpush1.msra.mxu0 0.0
        %317 = vmatprep.subr.mxu0 0.0
        %318 = vmatpush1.msra.mxu0 0.0
        %319 = vmatprep.subr.mxu0 0.0
        %320 = vmatpush1.msra.mxu0 0.0
        %321 = vmatprep.subr.mxu0 0.0
        %322 = vmatpush1.msra.mxu0 0.0
        %323 = vmatprep.subr.mxu0 0.0
        %324 = vmatpush1.msra.mxu0 0.0
        %325 = vmatprep.subr.mxu0 0.0
        %326 = vmatpush1.msra.mxu0 0.0
        %327 = vmatprep.subr.mxu0 0.0
        %328 = vmatpush1.msra.mxu0 0.0
        %329 = vmatprep.mubr.f32.mxu0 0.0
        %330 = vmatmul.mubr.f32.gmra.mrb[0].mxu0 %v263
        %v331 = vpop.f32.mrb[0].mxu0
        %v332 = vadd.f32 0.0, %v331
        %v333 = vpop.f32.mrb[0].mxu0
        %334 = vdwg.mxu0
        %v335 = vld [vmem:[#allocation2 + $0x1] sm:$0x1]
        %336 = vset.pattern.permute.xlu0 1
        %337 = vperm.xlu0 %336, %v230
        %v338 = vpop.permute.xlu0 %337
        %v340 = vlaneseq
        %v341 = vshrl.u32 %v340, 7
        %v342 = vsub.s32 0, %v341
        %v343 = vrot.slane %v335, %v342
        %v344 = vadd.f32 %v338, %v343
        %vm345 = vcmp.gt.f32.partialorder %v344, 0.0
        %v346 = vmul.f32 %v344, 0.2
        %v347 = vsel %vm345, %v344, %v346
        %v348 = vadd.f32 %v347, %v226
        %v349 = vsel %vm245, %v348, -inf
        %350 = vmax.xlane.f32.xlu0 %v349
        %v351 = vpop.xlane.xlu0 %350
        %v352 = vsub.f32 %v348, %v351
        %v353 = vmul.f32 %v352, 1.442695
        %v354 = vpow.pop %v353
        %v355 = vmul.f32 %v354, %v224
        %v356 = vsel %vm245, %v355, 0.0
        %357 = vadd.xlane.f32.xlu0 %v356
        %v358 = vpop.xlane.xlu0 %357
        %v359 = vmax.f32 %v358, 1e-20
        %v360 = vrcp.pop %v359
        %v361 = vmul.f32 %v359, %v360
        %v362 = vsub.f32 2.0, %v361
        %v363 = vmul.f32 %v360, %v362
        %v364 = vmul.f32 %v355, %v363
        %367 = vrot.lane.b32.xlu0 %v227, 120
        %v368 = vpop.permute.xlu0 %367
        %369 = vrot.lane.b32.xlu0 %v228, 120
        %v370 = vpop.permute.xlu0 %369
        %v374 = vsel %vm245, %v364, 0
        %376 = vmatprep.subr.mxu0 0.0
        %377 = vmatpush1.msra.mxu0 %v368
        %378 = vmatprep.subr.mxu0 0.0
        %379 = vmatpush1.msra.mxu0 %v370
        %380 = vmatprep.subr.mxu0 0.0
        %381 = vmatpush1.msra.mxu0 0.0
        %382 = vmatprep.subr.mxu0 0.0
        %383 = vmatpush1.msra.mxu0 0.0
        %384 = vmatprep.subr.mxu0 0.0
        %385 = vmatpush1.msra.mxu0 0.0
        %386 = vmatprep.subr.mxu0 0.0
        %387 = vmatpush1.msra.mxu0 0.0
        %388 = vmatprep.subr.mxu0 0.0
        %389 = vmatpush1.msra.mxu0 0.0
        %390 = vmatprep.subr.mxu0 0.0
        %391 = vmatpush1.msra.mxu0 0.0
        %392 = vmatprep.subr.mxu0 0.0
        %393 = vmatpush1.msra.mxu0 0.0
        %394 = vmatprep.subr.mxu0 0.0
        %395 = vmatpush1.msra.mxu0 0.0
        %396 = vmatprep.subr.mxu0 0.0
        %397 = vmatpush1.msra.mxu0 0.0
        %398 = vmatprep.subr.mxu0 0.0
        %399 = vmatpush1.msra.mxu0 0.0
        %400 = vmatprep.subr.mxu0 0.0
        %401 = vmatpush1.msra.mxu0 0.0
        %402 = vmatprep.subr.mxu0 0.0
        %403 = vmatpush1.msra.mxu0 0.0
        %404 = vmatprep.subr.mxu0 0.0
        %405 = vmatpush1.msra.mxu0 0.0
        %406 = vmatprep.subr.mxu0 0.0
        %407 = vmatpush1.msra.mxu0 0.0
        %408 = vmatprep.subr.mxu0 0.0
        %409 = vmatpush1.msra.mxu0 0.0
        %410 = vmatprep.subr.mxu0 0.0
        %411 = vmatpush1.msra.mxu0 0.0
        %412 = vmatprep.subr.mxu0 0.0
        %413 = vmatpush1.msra.mxu0 0.0
        %414 = vmatprep.subr.mxu0 0.0
        %415 = vmatpush1.msra.mxu0 0.0
        %416 = vmatprep.subr.mxu0 0.0
        %417 = vmatpush1.msra.mxu0 0.0
        %418 = vmatprep.subr.mxu0 0.0
        %419 = vmatpush1.msra.mxu0 0.0
        %420 = vmatprep.subr.mxu0 0.0
        %421 = vmatpush1.msra.mxu0 0.0
        %422 = vmatprep.subr.mxu0 0.0
        %423 = vmatpush1.msra.mxu0 0.0
        %424 = vmatprep.subr.mxu0 0.0
        %425 = vmatpush1.msra.mxu0 0.0
        %426 = vmatprep.subr.mxu0 0.0
        %427 = vmatpush1.msra.mxu0 0.0
        %428 = vmatprep.subr.mxu0 0.0
        %429 = vmatpush1.msra.mxu0 0.0
        %430 = vmatprep.subr.mxu0 0.0
        %431 = vmatpush1.msra.mxu0 0.0
        %432 = vmatprep.subr.mxu0 0.0
        %433 = vmatpush1.msra.mxu0 0.0
        %434 = vmatprep.subr.mxu0 0.0
        %435 = vmatpush1.msra.mxu0 0.0
        %436 = vmatprep.subr.mxu0 0.0
        %437 = vmatpush1.msra.mxu0 0.0
        %438 = vmatprep.subr.mxu0 0.0
        %439 = vmatpush1.msra.mxu0 0.0
        %440 = vmatprep.mubr.f32.mxu0 0.0
        %441 = vmatmul.mubr.f32.gmra.mrb[0].mxu0 %v374
        %v442 = vpop.f32.mrb[0].mxu0
        %v443 = vadd.f32 0.0, %v442
        %v444 = vpop.f32.mrb[0].mxu0
        %445 = vdwg.mxu0
        %447 = vrot.lane.b32.xlu0 %v443, 8
        %v448 = vpop.permute.xlu0 %447
        %vm450 = vcmask 64512
        %v451 = vsel %vm450, %v332, %v448
        %452 = vst.msk [vmem:[%s214] sm:$0xff] %vm245, %v451
        %s453 = sand.u32 %s121, 1
        %s454 = scalar_lea.sflag [#allocation4], %s453
        %s455 = sand.u32 %s121, 1
        %s456 = smul.addr %s455, 8
        %s457 = scalar_lea.vmem [#allocation5], %s456
        // Predicated region
        $region41: #{tpu_custom_call.1} parent=35 // pred_check
          %p458 = pneg %p131
        $region42: #{tpu_custom_call.1} parent=35 // pred_check_branch
          %460 = sbr.rel (%p458) target = $region44
        $region43: #{tpu_custom_call.1} parent=35 // pred_region
          %s462 = ssub.s32 128, 128
          %463 = vsyncadd %s454, %s462
          %s464 = smul.addr %s19, 128
          %s465 = scalar_lea.hbm %s4, %s464
          %s467 = sshll.u32 %s457, 4
          %s468 = int_to_ptr.vmem [resolvable:$true] %s467
          %470 = dma.vmem_to_hbm [thread:$0]  %s468, 128, %s465, %s454
        $region44: #{tpu_custom_call.1} parent=35 // pred_fallthru
          _
      $region36: #{tpu_custom_call.1} parent=5 // pred_fallthru
        _
      %p471 = scmp.le.s32.totalorder 2, %s14
      // Predicated region
      $region45: #{tpu_custom_call.1} parent=5 // pred_check
        %p472 = pneg %p471
      $region46: #{tpu_custom_call.1} parent=5 // pred_check_branch
        %474 = sbr.rel (%p472) target = $region48
      $region47: #{tpu_custom_call.1} parent=5 // pred_region
        %s475 = ssub.s32 %s14, 2
        // Predicated region
        $region49: #{tpu_custom_call.1} parent=47 // pred_check
          %p476 = pneg %p137
        $region50: #{tpu_custom_call.1} parent=47 // pred_check_branch
          %478 = sbr.rel (%p476) target = $region52
        $region51: #{tpu_custom_call.1} parent=47 // pred_region
          %s479 = sand.u32 %s122, 1
          %s480 = scalar_lea.sflag [#allocation4], %s479
          %s481 = sand.u32 %s122, 1
          %s482 = smul.addr %s481, 8
          %s483 = scalar_lea.vmem [#allocation5], %s482
          %484 = dma.done %s480, 128
        $region52: #{tpu_custom_call.1} parent=47 // pred_fallthru
          _
      $region48: #{tpu_custom_call.1} parent=5 // pred_fallthru
        _
    $region6: #{tpu_custom_call.1} parent=1 // loop_footer
      %s18 = sadd.s32 1, %s14
    $region7: #{tpu_custom_call.1} parent=1 // loop_footer_branch
      %13 = sbr.rel target = $region3
    $region8: #{tpu_custom_call.1} parent=1 // loop_exit
      _
    %485 = vsyncpa [#allocation3], 1
    %s486 = scalar_lea.sflag [#allocation3], 1
    %487 = vsyncpa %s486, 1
    %488 = vsyncpa [#allocation4], 1
    %s489 = scalar_lea.sflag [#allocation4], 1
    %490 = vsyncpa %s489, 1

</llo_original>
